<compile_context>
chip_gen: v6e
topology: v6e:2x2x1
jax: 0.10.0
libtpu: 0.0.40
codegen_flags: <defaults>
</compile_context>

<pallas_src>
import jax
import jax.numpy as jnp
from jax.experimental import pallas as pl
from jax.experimental.pallas import tpu as pltpu

LN_EPS = 1e-5


def conv_embed_kernel(px_ref, py_ref, wx_ref, wy_ref, prm_ref, o_ref):
    # px/py: (tm, K) bf16 im2col patches; wx/wy: (K, E) bf16 weights;
    # prm: (8, 2E) f32 packed params (row0=[b_en|b_de], row1=[g|g], row2=[b|b]);
    # o: (tm, 2E) bf16 lane-dense 128-wide store.
    E = wx_ref.shape[1]
    prm = prm_ref[...]
    gamma2 = prm[1:2, :]                      # (1, 2E)
    beta2 = prm[2:3, :]                       # (1, 2E)

    def normalize(p_ref, w_ref, bias):
        acc = jnp.dot(p_ref[...], w_ref[...],
                      preferred_element_type=jnp.float32)
        acc = acc + bias
        inv_e = 1.0 / acc.shape[-1]
        # Two-pass LayerNorm statistics (f32): no E[x^2]-E[x]^2 cancellation.
        mean = jnp.sum(acc, axis=-1, keepdims=True) * inv_e
        xc = acc - mean
        var = jnp.sum(xc * xc, axis=-1, keepdims=True) * inv_e
        return xc * jax.lax.rsqrt(var + LN_EPS)

    xn = normalize(px_ref, wx_ref, prm[0:1, :E])   # proj_en branch
    yn = normalize(py_ref, wy_ref, prm[0:1, E:])   # proj_de branch
    cat = jnp.concatenate([xn, yn], axis=-1)       # (tm, 2E) f32
    o_ref[...] = (cat * gamma2 + beta2).astype(o_ref.dtype)


def _round_up(a, m):
    return ((a + m - 1) // m) * m


def _im2col_patches(x, kh, kw, stride, pad):
    """x: (B, C, H, W) -> (B*Ho*Wo, C*kh*kw) bf16 patches (channel-major
    feature order, matching a flattened PyTorch conv weight (E,C,kh,kw))."""
    p = jax.lax.conv_general_dilated_patches(
        x.astype(jnp.bfloat16), (kh, kw), (stride, stride),
        [(pad, pad), (pad, pad)],
        dimension_numbers=("NCHW", "OIHW", "NHWC"))
    B, Ho, Wo, K = p.shape
    return p.reshape(B * Ho * Wo, K), Ho, Wo


def _choose_tile(M, K, E, out_itemsize, vmem_budget_bytes, tm_cap=2048):
    """tm from an explicit double-buffered VMEM budget; even grid steps."""
    # 2 buffers x (2 branches x bf16 patch row + output row)
    per_row = 2 * (2 * K * 2 + 2 * E * out_itemsize)
    resident = 2 * K * E * 2 + 8 * 2 * E * 4          # bf16 weights + f32 params
    avail = max(vmem_budget_bytes - resident, per_row * 8)
    tm_budget = max(8, (avail // per_row) // 8 * 8)
    tm = min(tm_cap, tm_budget, _round_up(M, 8))
    steps = max(2, pl.cdiv(M, tm))
    if steps % 2:
        steps += 1                                    # balance v7x's 2 TCs
    tm = min(tm, _round_up(pl.cdiv(M, steps), 8))
    working_set = resident + per_row * tm
    return tm, working_set


def conv_embed_forward_packed(x, y, params, *, stride=2, pad=1,
                              out_dtype=jnp.bfloat16,
                              vmem_budget_bytes=12 << 20):
    """Fused ConvEmbed.forward. Returns (packed (B, Ho*Wo, 2, E), h, w) where
    packed[..., 0, :] is embedding_x and packed[..., 1, :] is embedding_y."""
    w_en, b_en = params["w_en"], params["b_en"]
    w_de, b_de = params["w_de"], params["b_de"]
    gamma, beta = params["ln_g"], params["ln_b"]
    E = w_en.shape[0]

    px, Ho, Wo = _im2col_patches(x, w_en.shape[2], w_en.shape[3], stride, pad)
    py, Ho2, Wo2 = _im2col_patches(y, w_de.shape[2], w_de.shape[3], stride, pad)
    # Fused single-call path assumes both branches share the output geometry
    # (true for the module defaults: same kernel/stride/padding & input shape).
    assert (Ho, Wo) == (Ho2, Wo2) and px.shape == py.shape

    B = x.shape[0]
    M, K = px.shape

    def prep_weight(w):
        ke = w.shape[1] * w.shape[2] * w.shape[3]     # per-weight K (no silent
        assert ke == K                                # mis-reshape if shapes differ)
        return w.reshape(E, ke).T.astype(jnp.bfloat16)   # (K, E)

    wx, wy = prep_weight(w_en), prep_weight(w_de)

    # Pack the four (E,) f32 params into one lane-dense (8, 2E) tile.
    prm = jnp.zeros((8, 2 * E), jnp.float32)
    prm = prm.at[0].set(jnp.concatenate([b_en, b_de]).astype(jnp.float32))
    prm = prm.at[1].set(jnp.concatenate([gamma, gamma]).astype(jnp.float32))
    prm = prm.at[2].set(jnp.concatenate([beta, beta]).astype(jnp.float32))

    out_itemsize = jnp.dtype(out_dtype).itemsize
    tm, working_set = _choose_tile(M, K, E, out_itemsize, vmem_budget_bytes)
    grid = pl.cdiv(M, tm)
    vmem_limit = int(min(64 << 20, max(16 << 20, working_set + (4 << 20))))

    out = pl.pallas_call(
        conv_embed_kernel,
        out_shape=jax.ShapeDtypeStruct((M, 2 * E), out_dtype),
        grid_spec=pltpu.PrefetchScalarGridSpec(
            num_scalar_prefetch=0,
            grid=(grid,),
            in_specs=[
                pl.BlockSpec((tm, K), lambda i: (i, 0)),     # patches x (en)
                pl.BlockSpec((tm, K), lambda i: (i, 0)),     # patches y (de)
                pl.BlockSpec((K, E), lambda i: (0, 0)),      # w_en (resident)
                pl.BlockSpec((K, E), lambda i: (0, 0)),      # w_de (resident)
                pl.BlockSpec((8, 2 * E), lambda i: (0, 0)),  # packed params
            ],
            out_specs=pl.BlockSpec((tm, 2 * E), lambda i: (i, 0)),
        ),
        compiler_params=pltpu.CompilerParams(
            dimension_semantics=("parallel",),
            vmem_limit_bytes=vmem_limit),
    )(px, py, wx, wy, prm)

    return out.reshape(B, Ho * Wo, 2, E), Ho, Wo


def conv_embed_forward(x, y, params, **kwargs):
    """API-compatible wrapper mirroring ConvEmbed.forward:
    returns (embedding_x, embedding_y, h, w).  NOTE: the two slices below are
    XLA copies — performance-sensitive consumers should use
    conv_embed_forward_packed and index the packed slab downstream."""
    packed, Ho, Wo = conv_embed_forward_packed(x, y, params, **kwargs)
    return packed[:, :, 0, :], packed[:, :, 1, :], Ho, Wo


def _ref_branch(x, w, b, gamma, beta, stride, pad, cast_bf16=False):
    """Pure-JAX reference (conv + rearrange + LayerNorm)."""
    if cast_bf16:
        x = x.astype(jnp.bfloat16)
        w = w.astype(jnp.bfloat16)
    out = jax.lax.conv_general_dilated(
        x, w, (stride, stride), [(pad, pad), (pad, pad)],
        dimension_numbers=("NCHW", "OIHW", "NCHW"),
        preferred_element_type=jnp.float32)
    out = out + b.reshape(1, -1, 1, 1)
    Bn, Cc, Hh, Ww = out.shape
    e = out.transpose(0, 2, 3, 1).reshape(Bn, Hh * Ww, Cc)
    mean = e.mean(-1, keepdims=True)
    var = ((e - mean) ** 2).mean(-1, keepdims=True)
    return (e - mean) / jnp.sqrt(var + LN_EPS) * gamma + beta


if __name__ == "__main__":
    key = jax.random.PRNGKey(0)
    B, C_IN, H, W = 2, 3, 16, 16
    EMBED = 64
    KH = KW = 3

    ks = jax.random.split(key, 6)
    x = jax.random.normal(ks[0], (B, C_IN, H, W), jnp.float32)
    y = jax.random.normal(ks[1], (B, C_IN, H, W), jnp.float32)

    params = {
        "w_en": 0.1 * jax.random.normal(ks[2], (EMBED, C_IN, KH, KW), jnp.float32),
        "b_en": 0.1 * jax.random.normal(ks[3], (EMBED,), jnp.float32),
        "w_de": 0.1 * jax.random.normal(ks[4], (EMBED, C_IN, KH, KW), jnp.float32),
        "b_de": 0.1 * jax.random.normal(ks[5], (EMBED,), jnp.float32),
        "ln_g": jnp.ones((EMBED,), jnp.float32),    # nn.LayerNorm default init
        "ln_b": jnp.zeros((EMBED,), jnp.float32),
    }

    ex, ey, h, w = conv_embed_forward(x, y, params)
    jax.block_until_ready((ex, ey))

    assert ex.shape == (B, h * w, EMBED) and ey.shape == (B, h * w, EMBED)
    assert h == 8 and w == 8

    ex32 = ex.astype(jnp.float32)
    ey32 = ey.astype(jnp.float32)

    # Tight check vs a bf16-input reference (same MXU quantization as kernel;
    # extra slack only for the bf16 output cast).
    ref_xb = _ref_branch(x, params["w_en"], params["b_en"],
                         params["ln_g"], params["ln_b"], 2, 1, cast_bf16=True)
    ref_yb = _ref_branch(y, params["w_de"], params["b_de"],
                         params["ln_g"], params["ln_b"], 2, 1, cast_bf16=True)
    assert jnp.allclose(ex32, ref_xb, atol=2e-2, rtol=2e-2)
    assert jnp.allclose(ey32, ref_yb, atol=2e-2, rtol=2e-2)

    # Loose check vs the exact fp32 PyTorch-semantics reference (kernel feeds
    # the MXU in bf16 and stores bf16, so tolerance is relaxed accordingly).
    ref_x32 = _ref_branch(x, params["w_en"], params["b_en"],
                          params["ln_g"], params["ln_b"], 2, 1)
    ref_y32 = _ref_branch(y, params["w_de"], params["b_de"],
                          params["ln_g"], params["ln_b"], 2, 1)
    assert jnp.allclose(ex32, ref_x32, atol=6e-2, rtol=6e-2)
    assert jnp.allclose(ey32, ref_y32, atol=6e-2, rtol=6e-2)

    print("KERNEL_OK")
</pallas_src>

<mosaic_0001>
module attributes {stable_mosaic.version = 11 : i64} {
  func.func @conv_embed_kernel(%arg0: i32, %arg1: memref<64x27xbf16, #tpu.memory_space<vmem>>, %arg2: memref<64x27xbf16, #tpu.memory_space<vmem>>, %arg3: memref<27x64xbf16, #tpu.memory_space<vmem>>, %arg4: memref<27x64xbf16, #tpu.memory_space<vmem>>, %arg5: memref<8x128xf32, #tpu.memory_space<vmem>>, %arg6: memref<64x128xbf16, #tpu.memory_space<vmem>>) attributes {dimension_semantics = [#tpu.dimension_semantics<parallel>], iteration_bounds = array<i64: 2>, scalar_prefetch = 0 : i64, scratch_operands = 0 : i64, tpu.core_type = #tpu.core_type<tc>, window_params = [{transform_indices = @transform_0, window_bounds = array<i64: 64, 27>}, {transform_indices = @transform_1, window_bounds = array<i64: 64, 27>}, {pipeline_mode = #tpu.pipeline_mode<synchronous>, transform_indices = @transform_2, window_bounds = array<i64: 27, 64>}, {pipeline_mode = #tpu.pipeline_mode<synchronous>, transform_indices = @transform_3, window_bounds = array<i64: 27, 64>}, {pipeline_mode = #tpu.pipeline_mode<synchronous>, transform_indices = @transform_4, window_bounds = array<i64: 8, 128>}, {transform_indices = @transform_5, window_bounds = array<i64: 64, 128>}]} {
    %c0 = arith.constant 0 : index
    %c0_0 = arith.constant 0 : index
    %0 = vector.load %arg5[%c0, %c0_0] : memref<8x128xf32, #tpu.memory_space<vmem>>, vector<8x128xf32>
    %1 = vector.extract_strided_slice %0 {offsets = [1, 0], sizes = [1, 128], strides = [1, 1]} : vector<8x128xf32> to vector<1x128xf32>
    %2 = vector.extract_strided_slice %0 {offsets = [2, 0], sizes = [1, 128], strides = [1, 1]} : vector<8x128xf32> to vector<1x128xf32>
    %3 = vector.extract_strided_slice %0 {offsets = [0, 0], sizes = [1, 64], strides = [1, 1]} : vector<8x128xf32> to vector<1x64xf32>
    %c0_1 = arith.constant 0 : index
    %c0_2 = arith.constant 0 : index
    %4 = vector.load %arg1[%c0_1, %c0_2] : memref<64x27xbf16, #tpu.memory_space<vmem>>, vector<64x27xbf16>
    %c0_3 = arith.constant 0 : index
    %c0_4 = arith.constant 0 : index
    %5 = vector.load %arg3[%c0_3, %c0_4] : memref<27x64xbf16, #tpu.memory_space<vmem>>, vector<27x64xbf16>
    %cst = arith.constant dense<0.000000e+00> : vector<64x64xf32>
    %6 = tpu.matmul %4, %5, %cst {dimension_numbers = #tpu.dot_dimension_numbers<[1], [0], [0], [1], [0, 0, 1, 1], [], []>} : vector<64x27xbf16>, vector<27x64xbf16>, vector<64x64xf32> -> vector<64x64xf32>
    %7 = vector.broadcast %3 : vector<1x64xf32> to vector<64x64xf32>
    %8 = arith.addf %6, %7 : vector<64x64xf32>
    %cst_5 = arith.constant dense<0.000000e+00> : vector<64xf32>
    %9 = vector.multi_reduction <add>, %8, %cst_5 [1] : vector<64x64xf32> to vector<64xf32>
    %10 = vector.shape_cast %9 : vector<64xf32> to vector<64x1xf32>
    %cst_6 = arith.constant 1.562500e-02 : f32
    %11 = vector.broadcast %cst_6 : f32 to vector<64x1xf32>
    %12 = arith.mulf %10, %11 : vector<64x1xf32>
    %13 = vector.broadcast %12 : vector<64x1xf32> to vector<64x64xf32>
    %14 = arith.subf %8, %13 : vector<64x64xf32>
    %15 = arith.mulf %14, %14 : vector<64x64xf32>
    %cst_7 = arith.constant dense<0.000000e+00> : vector<64xf32>
    %16 = vector.multi_reduction <add>, %15, %cst_7 [1] : vector<64x64xf32> to vector<64xf32>
    %17 = vector.shape_cast %16 : vector<64xf32> to vector<64x1xf32>
    %cst_8 = arith.constant 1.562500e-02 : f32
    %18 = vector.broadcast %cst_8 : f32 to vector<64x1xf32>
    %19 = arith.mulf %17, %18 : vector<64x1xf32>
    %cst_9 = arith.constant 9.99999974E-6 : f32
    %20 = vector.broadcast %cst_9 : f32 to vector<64x1xf32>
    %21 = arith.addf %19, %20 : vector<64x1xf32>
    %22 = math.rsqrt %21 : vector<64x1xf32>
    %23 = vector.broadcast %22 : vector<64x1xf32> to vector<64x64xf32>
    %24 = arith.mulf %14, %23 : vector<64x64xf32>
    %25 = vector.extract_strided_slice %0 {offsets = [0, 64], sizes = [1, 64], strides = [1, 1]} : vector<8x128xf32> to vector<1x64xf32>
    %c0_10 = arith.constant 0 : index
    %c0_11 = arith.constant 0 : index
    %26 = vector.load %arg2[%c0_10, %c0_11] : memref<64x27xbf16, #tpu.memory_space<vmem>>, vector<64x27xbf16>
    %c0_12 = arith.constant 0 : index
    %c0_13 = arith.constant 0 : index
    %27 = vector.load %arg4[%c0_12, %c0_13] : memref<27x64xbf16, #tpu.memory_space<vmem>>, vector<27x64xbf16>
    %cst_14 = arith.constant dense<0.000000e+00> : vector<64x64xf32>
    %28 = tpu.matmul %26, %27, %cst_14 {dimension_numbers = #tpu.dot_dimension_numbers<[1], [0], [0], [1], [0, 0, 1, 1], [], []>} : vector<64x27xbf16>, vector<27x64xbf16>, vector<64x64xf32> -> vector<64x64xf32>
    %29 = vector.broadcast %25 : vector<1x64xf32> to vector<64x64xf32>
    %30 = arith.addf %28, %29 : vector<64x64xf32>
    %cst_15 = arith.constant dense<0.000000e+00> : vector<64xf32>
    %31 = vector.multi_reduction <add>, %30, %cst_15 [1] : vector<64x64xf32> to vector<64xf32>
    %32 = vector.shape_cast %31 : vector<64xf32> to vector<64x1xf32>
    %cst_16 = arith.constant 1.562500e-02 : f32
    %33 = vector.broadcast %cst_16 : f32 to vector<64x1xf32>
    %34 = arith.mulf %32, %33 : vector<64x1xf32>
    %35 = vector.broadcast %34 : vector<64x1xf32> to vector<64x64xf32>
    %36 = arith.subf %30, %35 : vector<64x64xf32>
    %37 = arith.mulf %36, %36 : vector<64x64xf32>
    %cst_17 = arith.constant dense<0.000000e+00> : vector<64xf32>
    %38 = vector.multi_reduction <add>, %37, %cst_17 [1] : vector<64x64xf32> to vector<64xf32>
    %39 = vector.shape_cast %38 : vector<64xf32> to vector<64x1xf32>
    %cst_18 = arith.constant 1.562500e-02 : f32
    %40 = vector.broadcast %cst_18 : f32 to vector<64x1xf32>
    %41 = arith.mulf %39, %40 : vector<64x1xf32>
    %cst_19 = arith.constant 9.99999974E-6 : f32
    %42 = vector.broadcast %cst_19 : f32 to vector<64x1xf32>
    %43 = arith.addf %41, %42 : vector<64x1xf32>
    %44 = math.rsqrt %43 : vector<64x1xf32>
    %45 = vector.broadcast %44 : vector<64x1xf32> to vector<64x64xf32>
    %46 = arith.mulf %36, %45 : vector<64x64xf32>
    %47 = tpu.concatenate %24, %46 in 1 : vector<64x64xf32>, vector<64x64xf32> -> vector<64x128xf32>
    %48 = vector.broadcast %1 : vector<1x128xf32> to vector<64x128xf32>
    %49 = arith.mulf %47, %48 : vector<64x128xf32>
    %50 = vector.broadcast %2 : vector<1x128xf32> to vector<64x128xf32>
    %51 = arith.addf %49, %50 : vector<64x128xf32>
    %52 = arith.truncf %51 : vector<64x128xf32> to vector<64x128xbf16>
    %c0_20 = arith.constant 0 : index
    %c0_21 = arith.constant 0 : index
    %53 = vector.load %arg6[%c0_20, %c0_21] : memref<64x128xbf16, #tpu.memory_space<vmem>>, vector<64x128xbf16>
    tpu.vector_store %arg6[%c0_20, %c0_21], %52 {strides = array<i32>} : memref<64x128xbf16, #tpu.memory_space<vmem>>, vector<64x128xbf16>,
    return
  }
  func.func @transform_0(%arg0: i32) -> (i32, i32) {
    %c0_i32 = arith.constant 0 : i32
    %c0_i32_0 = arith.constant 0 : i32
    return %arg0, %c0_i32 : i32, i32
  }
  func.func @transform_1(%arg0: i32) -> (i32, i32) {
    %c0_i32 = arith.constant 0 : i32
    %c0_i32_0 = arith.constant 0 : i32
    return %arg0, %c0_i32 : i32, i32
  }
  func.func @transform_2(%arg0: i32) -> (i32, i32) {
    %c0_i32 = arith.constant 0 : i32
    %c0_i32_0 = arith.constant 0 : i32
    %c0_i32_1 = arith.constant 0 : i32
    return %c0_i32, %c0_i32_0 : i32, i32
  }
  func.func @transform_3(%arg0: i32) -> (i32, i32) {
    %c0_i32 = arith.constant 0 : i32
    %c0_i32_0 = arith.constant 0 : i32
    %c0_i32_1 = arith.constant 0 : i32
    return %c0_i32, %c0_i32_0 : i32, i32
  }
  func.func @transform_4(%arg0: i32) -> (i32, i32) {
    %c0_i32 = arith.constant 0 : i32
    %c0_i32_0 = arith.constant 0 : i32
    %c0_i32_1 = arith.constant 0 : i32
    return %c0_i32, %c0_i32_0 : i32, i32
  }
  func.func @transform_5(%arg0: i32) -> (i32, i32) {
    %c0_i32 = arith.constant 0 : i32
    %c0_i32_0 = arith.constant 0 : i32
    return %arg0, %c0_i32 : i32, i32
  }
}

</mosaic_0001>

<llo_original>
// kernel: tpu_custom_call.1
$region0: #{tpu_custom_call.1}
  #allocation0 [shape = 'u32[]', space=smem, size = 0x4, offset = 0x4, fixed_abs, tag = 'smem constant byte address 0x4 - core index']
  #allocation1 [shape = 'u32[144,128]{1,0:T(1,128)}', space=vmem, size = 0x12000, scoped, tag = 'internal scratch']
  %s0 = inlined_call_operand.vmem [shape: bf16[128,27], index: 0, kind: input, shape index: {}]
  %s1 = inlined_call_operand.vmem [shape: bf16[128,27], index: 1, kind: input, shape index: {}]
  %s2 = inlined_call_operand.vmem [shape: bf16[27,64], index: 2, kind: input, shape index: {}]
  %s3 = inlined_call_operand.vmem [shape: bf16[27,64], index: 3, kind: input, shape index: {}]
  %s4 = inlined_call_operand.vmem [shape: f32[8,128], index: 4, kind: input, shape index: {}]
  %s5 = inlined_call_operand.hbm [shape: bf16[128,128], index: 5, kind: output, shape index: {}]
  %s6 = sld [smem:[#allocation0]]
  $region53: #{tpu_custom_call.1} parent=0
    _
  %s8 = ssub.s32 1, %s6
  %s9 = scalar_select 0, %s8, %s6
  $region1: #{tpu_custom_call.1} parent=0
    #allocation2 [shape = 'u8[32768]{0}', space=vmem, size = 0x8000, scoped, tag = 'output window, operand 0']
    #allocation3 [shape = 's32[2]{0}', space=sflag, size = 0x8, scoped, tag = 'scoped memory for tpu_custom_call.1']
    %10 = vsyncpa [#allocation3], 0
    %s11 = scalar_lea.sflag [#allocation3], 1
    %12 = vsyncpa %s11, 0
    loop: start=0, step=1, limit=4
    $region2: #{tpu_custom_call.1} parent=1 // loop_pre_header
      _
    $region3: #{tpu_custom_call.1} parent=1 // loop_header
      %s14 = sphi 0, %s18
      %p15 = scmp.ge.s32.totalorder %s14, 4
      %s24 = sphi 0, %s26
      %s27 = sphi 0, %s24
      %s28 = sphi 0, %s27
      %s44 = sphi 0, %s28
      %s50 = sphi 0, %s52
      %s53 = sphi 0, %s50
      %s54 = sphi 0, %s53
      %s70 = sphi 0, %s54
      %s74 = sphi 0, %s74
      %s76 = sphi 0, %s74
      %s77 = sphi 0, %s76
      %s91 = sphi 0, %s77
      %s95 = sphi 0, %s95
      %s97 = sphi 0, %s95
      %s98 = sphi 0, %s97
      %s112 = sphi 0, %s98
      %s116 = sphi 0, %s116
      %s118 = sphi 0, %s116
      %s119 = sphi 0, %s118
      %s133 = sphi 0, %s119
      %s139 = sphi 0, %s141
      %s142 = sphi 0, %s139
      %s143 = sphi 0, %s142
      %s159 = sphi 0, %s143
    $region4: #{tpu_custom_call.1} parent=1 // loop_header_branch
      %17 = sbr.rel (%p15) target = $region8
    $region5: #{tpu_custom_call.1} parent=1 // loop_body
      %s19 = ssub.s32 %s14, 1
      %s20 = ssub.s32 %s14, 2
      %s21 = sadd.s32 %s14, 1
      %s22 = ssub.s32 %s14, %s21
      %p23 = scmp.eq.s32.totalorder %s22, 0
      %s25 = sadd.s32 %s24, 1
      %s26 = scalar_select %p23, %s24, %s25
      %p29 = pneg %p23
      %p30 = scmp.eq.s32.totalorder %s14, 1
      %p31 = por %p29, %p30
      %p32 = scmp.ne.s32.totalorder %s24, %s27
      %p33 = scmp.eq.s32.totalorder %s14, 0
      %p34 = por %p32, %p33
      %p35 = scmp.ne.s32.totalorder %s24, %s27
      %p36 = scmp.eq.s32.totalorder %s19, 1
      %p37 = por %p35, %p36
      %p38 = scmp.ne.s32.totalorder %s27, %s28
      %p39 = scmp.eq.s32.totalorder %s19, 0
      %p40 = por %p38, %p39
      %p41 = scmp.ne.s32.totalorder %s27, %s28
      %p42 = scmp.eq.s32.totalorder %s20, 1
      %p43 = por %p41, %p42
      %p45 = scmp.ne.s32.totalorder %s28, %s44
      %p46 = scmp.eq.s32.totalorder %s20, 0
      %p47 = por %p45, %p46
      %s48 = ssub.s32 %s14, %s21
      %p49 = scmp.eq.s32.totalorder %s48, 0
      %s51 = sadd.s32 %s50, 1
      %s52 = scalar_select %p49, %s50, %s51
      %p55 = pneg %p49
      %p56 = scmp.eq.s32.totalorder %s14, 1
      %p57 = por %p55, %p56
      %p58 = scmp.ne.s32.totalorder %s50, %s53
      %p59 = scmp.eq.s32.totalorder %s14, 0
      %p60 = por %p58, %p59
      %p61 = scmp.ne.s32.totalorder %s50, %s53
      %p62 = scmp.eq.s32.totalorder %s19, 1
      %p63 = por %p61, %p62
      %p64 = scmp.ne.s32.totalorder %s53, %s54
      %p65 = scmp.eq.s32.totalorder %s19, 0
      %p66 = por %p64, %p65
      %p67 = scmp.ne.s32.totalorder %s53, %s54
      %p68 = scmp.eq.s32.totalorder %s20, 1
      %p69 = por %p67, %p68
      %p71 = scmp.ne.s32.totalorder %s54, %s70
      %p72 = scmp.eq.s32.totalorder %s20, 0
      %p73 = por %p71, %p72
      %s75 = sadd.s32 %s74, 1
      %p78 = scmp.eq.s32.totalorder %s14, 1
      %p79 = scmp.ne.s32.totalorder %s74, %s76
      %p80 = scmp.eq.s32.totalorder %s14, 0
      %p81 = por %p79, %p80
      %p82 = scmp.ne.s32.totalorder %s74, %s76
      %p83 = scmp.eq.s32.totalorder %s19, 1
      %p84 = por %p82, %p83
      %p85 = scmp.ne.s32.totalorder %s76, %s77
      %p86 = scmp.eq.s32.totalorder %s19, 0
      %p87 = por %p85, %p86
      %p88 = scmp.ne.s32.totalorder %s76, %s77
      %p89 = scmp.eq.s32.totalorder %s20, 1
      %p90 = por %p88, %p89
      %p92 = scmp.ne.s32.totalorder %s77, %s91
      %p93 = scmp.eq.s32.totalorder %s20, 0
      %p94 = por %p92, %p93
      %s96 = sadd.s32 %s95, 1
      %p99 = scmp.eq.s32.totalorder %s14, 1
      %p100 = scmp.ne.s32.totalorder %s95, %s97
      %p101 = scmp.eq.s32.totalorder %s14, 0
      %p102 = por %p100, %p101
      %p103 = scmp.ne.s32.totalorder %s95, %s97
      %p104 = scmp.eq.s32.totalorder %s19, 1
      %p105 = por %p103, %p104
      %p106 = scmp.ne.s32.totalorder %s97, %s98
      %p107 = scmp.eq.s32.totalorder %s19, 0
      %p108 = por %p106, %p107
      %p109 = scmp.ne.s32.totalorder %s97, %s98
      %p110 = scmp.eq.s32.totalorder %s20, 1
      %p111 = por %p109, %p110
      %p113 = scmp.ne.s32.totalorder %s98, %s112
      %p114 = scmp.eq.s32.totalorder %s20, 0
      %p115 = por %p113, %p114
      %s117 = sadd.s32 %s116, 1
      %p120 = scmp.eq.s32.totalorder %s14, 1
      %p121 = scmp.ne.s32.totalorder %s116, %s118
      %p122 = scmp.eq.s32.totalorder %s14, 0
      %p123 = por %p121, %p122
      %p124 = scmp.ne.s32.totalorder %s116, %s118
      %p125 = scmp.eq.s32.totalorder %s19, 1
      %p126 = por %p124, %p125
      %p127 = scmp.ne.s32.totalorder %s118, %s119
      %p128 = scmp.eq.s32.totalorder %s19, 0
      %p129 = por %p127, %p128
      %p130 = scmp.ne.s32.totalorder %s118, %s119
      %p131 = scmp.eq.s32.totalorder %s20, 1
      %p132 = por %p130, %p131
      %p134 = scmp.ne.s32.totalorder %s119, %s133
      %p135 = scmp.eq.s32.totalorder %s20, 0
      %p136 = por %p134, %p135
      %s137 = ssub.s32 %s14, %s21
      %p138 = scmp.eq.s32.totalorder %s137, 0
      %s140 = sadd.s32 %s139, 1
      %s141 = scalar_select %p138, %s139, %s140
      %p144 = pneg %p138
      %p145 = scmp.eq.s32.totalorder %s14, 1
      %p146 = por %p144, %p145
      %p147 = scmp.ne.s32.totalorder %s139, %s142
      %p148 = scmp.eq.s32.totalorder %s14, 0
      %p149 = por %p147, %p148
      %p150 = scmp.ne.s32.totalorder %s139, %s142
      %p151 = scmp.eq.s32.totalorder %s19, 1
      %p152 = por %p150, %p151
      %p153 = scmp.ne.s32.totalorder %s142, %s143
      %p154 = scmp.eq.s32.totalorder %s19, 0
      %p155 = por %p153, %p154
      %p156 = scmp.ne.s32.totalorder %s142, %s143
      %p157 = scmp.eq.s32.totalorder %s20, 1
      %p158 = por %p156, %p157
      %p160 = scmp.ne.s32.totalorder %s143, %s159
      %p161 = scmp.eq.s32.totalorder %s20, 0
      %p162 = por %p160, %p161
      %p163 = scmp.le.s32.totalorder 1, %s14
      %p164 = scmp.lt.s32.totalorder %s14, 3
      %p165 = pnand %p163, %p164
      %p166 = pneg %p165
      // Predicated region
      $region9: #{tpu_custom_call.1} parent=5 // pred_check
        _
      $region10: #{tpu_custom_call.1} parent=5 // pred_check_branch
        %168 = sbr.rel (%p165) target = $region12
      $region11: #{tpu_custom_call.1} parent=5 // pred_region
        %s169 = ssub.s32 %s14, 1
        // Predicated region
        $region13: #{tpu_custom_call.1} parent=11 // pred_check
          %p170 = pneg %p87
        $region14: #{tpu_custom_call.1} parent=11 // pred_check_branch
          %172 = sbr.rel (%p170) target = $region16
        $region15: #{tpu_custom_call.1} parent=11 // pred_region
          _
        $region16: #{tpu_custom_call.1} parent=11 // pred_fallthru
          _
        // Predicated region
        $region17: #{tpu_custom_call.1} parent=11 // pred_check
          %p173 = pneg %p108
        $region18: #{tpu_custom_call.1} parent=11 // pred_check_branch
          %175 = sbr.rel (%p173) target = $region20
        $region19: #{tpu_custom_call.1} parent=11 // pred_region
          _
        $region20: #{tpu_custom_call.1} parent=11 // pred_fallthru
          _
        // Predicated region
        $region21: #{tpu_custom_call.1} parent=11 // pred_check
          %p176 = pneg %p129
        $region22: #{tpu_custom_call.1} parent=11 // pred_check_branch
          %178 = sbr.rel (%p176) target = $region24
        $region23: #{tpu_custom_call.1} parent=11 // pred_region
          _
        $region24: #{tpu_custom_call.1} parent=11 // pred_fallthru
          _
      $region12: #{tpu_custom_call.1} parent=5 // pred_fallthru
        _
      %p179 = scmp.lt.s32.totalorder %s14, 2
      // Predicated region
      $region25: #{tpu_custom_call.1} parent=5 // pred_check
        %p180 = pneg %p179
      $region26: #{tpu_custom_call.1} parent=5 // pred_check_branch
        %182 = sbr.rel (%p180) target = $region28
      $region27: #{tpu_custom_call.1} parent=5 // pred_region
        // Predicated region
        $region29: #{tpu_custom_call.1} parent=27 // pred_check
          %p183 = pneg %p34
        $region30: #{tpu_custom_call.1} parent=27 // pred_check_branch
          %185 = sbr.rel (%p183) target = $region32
        $region31: #{tpu_custom_call.1} parent=27 // pred_region
          %s186 = smul.u32 8, %s14
          %p187 = scmp.lt.s32.totalorder %s186, 15
          %s188 = scalar_select %p187, %s186, 15
          %s189 = smul.addr %s188, 4
          %s190 = scalar_lea.vmem %s0, %s189
          %s191 = smul.u32 8, %s14
        $region32: #{tpu_custom_call.1} parent=27 // pred_fallthru
          _
        // Predicated region
        $region33: #{tpu_custom_call.1} parent=27 // pred_check
          %p192 = pneg %p60
        $region34: #{tpu_custom_call.1} parent=27 // pred_check_branch
          %194 = sbr.rel (%p192) target = $region36
        $region35: #{tpu_custom_call.1} parent=27 // pred_region
          %s195 = smul.u32 8, %s14
          %p196 = scmp.lt.s32.totalorder %s195, 15
          %s197 = scalar_select %p196, %s195, 15
          %s198 = smul.addr %s197, 4
          %s199 = scalar_lea.vmem %s1, %s198
          %s200 = smul.u32 8, %s14
        $region36: #{tpu_custom_call.1} parent=27 // pred_fallthru
          _
      $region28: #{tpu_custom_call.1} parent=5 // pred_fallthru
        _
      %p201 = scmp.le.s32.totalorder 1, %s14
      %p202 = scmp.lt.s32.totalorder %s14, 3
      %p203 = pnand %p201, %p202
      %p204 = pneg %p203
      // Predicated region
      $region37: #{tpu_custom_call.1} parent=5 // pred_check
        _
      $region38: #{tpu_custom_call.1} parent=5 // pred_check_branch
        %206 = sbr.rel (%p203) target = $region40
      $region39: #{tpu_custom_call.1} parent=5 // pred_region
        %s207 = ssub.s32 %s14, 1
        %s208 = smul.u32 8, %s19
        %p209 = scmp.lt.s32.totalorder %s208, 15
        %s210 = scalar_select %p209, %s208, 15
        %s211 = smul.addr %s210, 4
        %s212 = scalar_lea.vmem %s0, %s211
        %p213 = pneg %p40
        %p214 = pneg %p37
        %s215 = smul.u32 8, %s19
        %p216 = scmp.lt.s32.totalorder %s215, 15
        %s217 = scalar_select %p216, %s215, 15
        %s218 = smul.addr %s217, 4
        %s219 = scalar_lea.vmem %s1, %s218
        %p220 = pneg %p66
        %p221 = pneg %p63
        %p222 = pneg %p87
        %p223 = pneg %p84
        %p224 = pneg %p108
        %p225 = pneg %p105
        %p226 = pneg %p129
        %p227 = pneg %p126
        %p228 = pneg %p155
        %p229 = pneg %p152
        %s230 = sand.u32 %s142, 1
        %s231 = scalar_lea.sflag [#allocation3], %s230
        %s232 = sand.u32 %s142, 1
        %s233 = smul.addr %s232, 32
        %s234 = scalar_lea.vmem [#allocation2], %s233
        %s235 = smul.u32 8, %s19
        %p236 = scmp.lt.s32.totalorder %s235, 15
        %s237 = scalar_select %p236, %s235, 15
        %s238 = smul.addr %s237, 4
        %s239 = scalar_lea.vmem %s0, %s238
        %s240 = smul.u32 8, %s19
        %s241 = smul.u32 8, %s19
        %p242 = scmp.lt.s32.totalorder %s241, 15
        %s243 = scalar_select %p242, %s241, 15
        %s244 = smul.addr %s243, 4
        %s245 = scalar_lea.vmem %s1, %s244
        %s246 = smul.u32 8, %s19
        %s247 = smul.u32 8, %s19
        %v249 = vld [vmem:[%s4] sm:$0xff]
        %v250 = vld [vmem:[%s239] sm:$0xf]
        %v251 = vld [vmem:[%s239 + $0x4] sm:$0xf]
        %v252 = vld [vmem:[%s239 + $0x8] sm:$0xf]
        %v253 = vld [vmem:[%s239 + $0xc] sm:$0xf]
        %v254 = vld [vmem:[%s239 + $0x10] sm:$0xf]
        %v255 = vld [vmem:[%s239 + $0x14] sm:$0xf]
        %v256 = vld [vmem:[%s239 + $0x18] sm:$0xf]
        %v257 = vld [vmem:[%s239 + $0x1c] sm:$0xf]
        %v258 = vld [vmem:[%s2] sm:$0xf]
        %v259 = vld [vmem:[%s2 + $0x4] sm:$0xf]
        %v260 = vld [vmem:[%s2 + $0x8] sm:$0xf]
        %v261 = vld [vmem:[%s2 + $0xc] sm:$0x3]
        %v262 = vlaneseq
        %v263 = vshrl.u32 %v262, 7
        %v264 = vsub.s32 0, %v263
        %v265 = vrot.slane %v249, %v264
        %v274 = vunpack.c.l.b16 %v250
        %v275 = vunpack.c.l.b16 %v251
        %v276 = vunpack.c.l.b16 %v252
        %v277 = vunpack.c.l.b16 %v253
        %v278 = vunpack.c.l.b16 %v254
        %v279 = vunpack.c.l.b16 %v255
        %v280 = vunpack.c.l.b16 %v256
        %v281 = vunpack.c.l.b16 %v257
        %v282 = vpack.c.b16 %v275, %v274
        %v283 = vpack.c.b16 %v277, %v276
        %v284 = vpack.c.b16 %v279, %v278
        %v285 = vpack.c.b16 %v281, %v280
        %v290 = vunpack.c.l.b16 %v258
        %v291 = vunpack.c.l.b16 %v259
        %v292 = vunpack.c.l.b16 %v260
        %v293 = vunpack.c.l.b16 %v261
        %v294 = vpack.c.b16 %v291, %v290
        %v295 = vpack.c.b16 %v293, %v292
        %vm297 = vcmask 220160
        %v299 = vsel %vm297, %v282, 0
        %v302 = vsel %vm297, %v283, 0
        %v305 = vsel %vm297, %v284, 0
        %v308 = vsel %vm297, %v285, 0
        %vm310 = vcmask 1044480
        %vm311 = vcmask 1045504
        %v312 = vsel %vm310, 4294967295, 65535
        %v313 = vsel %vm311, %v312, 0
        %v315 = vand.u32 %v295, %v313
        %317 = vmatprep.subr.bf16.mxu0 0
        %318 = vmatpush1.bf16.msra.mxu0 0
        %319 = vmatprep.subr.bf16.mxu0 0
        %320 = vmatpush1.bf16.msra.mxu0 0
        %321 = vmatprep.subr.bf16.mxu0 0
        %322 = vmatpush1.bf16.msra.mxu0 0
        %323 = vmatprep.subr.bf16.mxu0 0
        %324 = vmatpush1.bf16.msra.mxu0 0
        %325 = vmatprep.subr.bf16.mxu0 0
        %326 = vmatpush1.bf16.msra.mxu0 0
        %327 = vmatprep.subr.bf16.mxu0 0
        %328 = vmatpush1.bf16.msra.mxu0 0
        %329 = vmatprep.subr.bf16.mxu0 0
        %330 = vmatpush1.bf16.msra.mxu0 %v315
        %331 = vmatprep.subr.bf16.mxu0 0
        %332 = vmatpush1.bf16.msra.mxu0 %v294
        %333 = vmatprep.subr.bf16.mxu0 0
        %334 = vmatpush2.bf16.msra.mxu0 0
        %335 = vmatprep.subr.bf16.mxu0 0
        %336 = vmatpush2.bf16.msra.mxu0 0
        %337 = vmatprep.subr.bf16.mxu0 0
        %338 = vmatpush2.bf16.msra.mxu0 0
        %339 = vmatprep.subr.bf16.mxu0 0
        %340 = vmatpush2.bf16.msra.mxu0 0
        %341 = vmatprep.subr.bf16.mxu0 0
        %342 = vmatpush2.bf16.msra.mxu0 0
        %343 = vmatprep.subr.bf16.mxu0 0
        %344 = vmatpush2.bf16.msra.mxu0 0
        %345 = vmatprep.subr.bf16.mxu0 0
        %346 = vmatpush2.bf16.msra.mxu0 0
        %347 = vmatprep.subr.bf16.mxu0 0
        %348 = vmatpush2.bf16.msra.mxu0 0
        %349 = vmatprep.mubr.bf16.mxu0 0
        %350 = vmatmul.mubr.bf16.gmra.mxu0 %v299
        %v351 = vpop.f32.mrf.mxu0
        %v352 = vadd.f32 %v265, %v351
        %v353 = vpop.f32.mrf.mxu0
        %v354 = vpop.f32.mrf.mxu0
        %v355 = vadd.f32 %v265, %v354
        %v356 = vpop.f32.mrf.mxu0
        %357 = vmatprep.mubr.bf16.mxu0 0
        %358 = vmatmul.mubr.bf16.gmra.mxu0 %v302
        %v359 = vpop.f32.mrf.mxu0
        %v360 = vadd.f32 %v265, %v359
        %v361 = vpop.f32.mrf.mxu0
        %v362 = vpop.f32.mrf.mxu0
        %v363 = vadd.f32 %v265, %v362
        %v364 = vpop.f32.mrf.mxu0
        %365 = vmatprep.mubr.bf16.mxu0 0
        %366 = vmatmul.mubr.bf16.gmra.mxu0 %v305
        %v367 = vpop.f32.mrf.mxu0
        %v368 = vadd.f32 %v265, %v367
        %v369 = vpop.f32.mrf.mxu0
        %v370 = vpop.f32.mrf.mxu0
        %v371 = vadd.f32 %v265, %v370
        %v372 = vpop.f32.mrf.mxu0
        %373 = vmatprep.mubr.bf16.mxu0 0
        %374 = vmatmul.mubr.bf16.gmra.mxu0 %v308
        %v375 = vpop.f32.mrf.mxu0
        %v376 = vadd.f32 %v265, %v375
        %v377 = vpop.f32.mrf.mxu0
        %v378 = vpop.f32.mrf.mxu0
        %v379 = vadd.f32 %v265, %v378
        %v380 = vpop.f32.mrf.mxu0
        %381 = vdwg.mxu0
        %vm382 = vcmask 523264
        %v383 = vsel %vm382, %v352, 0.0
        %384 = vadd.xlane.f32.xlu0 %v383
        %v385 = vpop.xlane.xlu0 %384
        %v386 = vsel %vm382, %v355, 0.0
        %387 = vadd.xlane.f32.xlu0 %v386
        %v388 = vpop.xlane.xlu0 %387
        %v389 = vsel %vm382, %v360, 0.0
        %390 = vadd.xlane.f32.xlu0 %v389
        %v391 = vpop.xlane.xlu0 %390
        %v392 = vsel %vm382, %v363, 0.0
        %393 = vadd.xlane.f32.xlu0 %v392
        %v394 = vpop.xlane.xlu0 %393
        %v395 = vsel %vm382, %v368, 0.0
        %396 = vadd.xlane.f32.xlu0 %v395
        %v397 = vpop.xlane.xlu0 %396
        %v398 = vsel %vm382, %v371, 0.0
        %399 = vadd.xlane.f32.xlu0 %v398
        %v400 = vpop.xlane.xlu0 %399
        %v401 = vsel %vm382, %v376, 0.0
        %402 = vadd.xlane.f32.xlu0 %v401
        %v403 = vpop.xlane.xlu0 %402
        %v404 = vsel %vm382, %v379, 0.0
        %405 = vadd.xlane.f32.xlu0 %v404
        %v406 = vpop.xlane.xlu0 %405
        %v407 = vmul.f32 %v385, 0.015625
        %v408 = vmul.f32 %v388, 0.015625
        %v409 = vmul.f32 %v391, 0.015625
        %v410 = vmul.f32 %v394, 0.015625
        %v411 = vmul.f32 %v397, 0.015625
        %v412 = vmul.f32 %v400, 0.015625
        %v413 = vmul.f32 %v403, 0.015625
        %v414 = vmul.f32 %v406, 0.015625
        %v415 = vsub.f32 %v352, %v407
        %v416 = vsub.f32 %v355, %v408
        %v417 = vsub.f32 %v360, %v409
        %v418 = vsub.f32 %v363, %v410
        %v419 = vsub.f32 %v368, %v411
        %v420 = vsub.f32 %v371, %v412
        %v421 = vsub.f32 %v376, %v413
        %v422 = vsub.f32 %v379, %v414
        %v423 = vmul.f32 %v415, %v415
        %v424 = vmul.f32 %v416, %v416
        %v425 = vmul.f32 %v417, %v417
        %v426 = vmul.f32 %v418, %v418
        %v427 = vmul.f32 %v419, %v419
        %v428 = vmul.f32 %v420, %v420
        %v429 = vmul.f32 %v421, %v421
        %v430 = vmul.f32 %v422, %v422
        %v431 = vsel %vm382, %v423, 0.0
        %432 = vadd.xlane.f32.xlu0 %v431
        %v433 = vpop.xlane.xlu0 %432
        %v434 = vsel %vm382, %v424, 0.0
        %435 = vadd.xlane.f32.xlu0 %v434
        %v436 = vpop.xlane.xlu0 %435
        %v437 = vsel %vm382, %v425, 0.0
        %438 = vadd.xlane.f32.xlu0 %v437
        %v439 = vpop.xlane.xlu0 %438
        %v440 = vsel %vm382, %v426, 0.0
        %441 = vadd.xlane.f32.xlu0 %v440
        %v442 = vpop.xlane.xlu0 %441
        %v443 = vsel %vm382, %v427, 0.0
        %444 = vadd.xlane.f32.xlu0 %v443
        %v445 = vpop.xlane.xlu0 %444
        %v446 = vsel %vm382, %v428, 0.0
        %447 = vadd.xlane.f32.xlu0 %v446
        %v448 = vpop.xlane.xlu0 %447
        %v449 = vsel %vm382, %v429, 0.0
        %450 = vadd.xlane.f32.xlu0 %v449
        %v451 = vpop.xlane.xlu0 %450
        %v452 = vsel %vm382, %v430, 0.0
        %453 = vadd.xlane.f32.xlu0 %v452
        %v454 = vpop.xlane.xlu0 %453
        %v455 = vmul.f32 %v433, 0.015625
        %v456 = vmul.f32 %v436, 0.015625
        %v457 = vmul.f32 %v439, 0.015625
        %v458 = vmul.f32 %v442, 0.015625
        %v459 = vmul.f32 %v445, 0.015625
        %v460 = vmul.f32 %v448, 0.015625
        %v461 = vmul.f32 %v451, 0.015625
        %v462 = vmul.f32 %v454, 0.015625
        %v463 = vadd.f32 %v455, 1e-05
        %v464 = vadd.f32 %v456, 1e-05
        %v465 = vadd.f32 %v457, 1e-05
        %v466 = vadd.f32 %v458, 1e-05
        %v467 = vadd.f32 %v459, 1e-05
        %v468 = vadd.f32 %v460, 1e-05
        %v469 = vadd.f32 %v461, 1e-05
        %v470 = vadd.f32 %v462, 1e-05
        %v471 = vrsqrt.pop %v463
        %v472 = vrsqrt.pop %v464
        %v473 = vrsqrt.pop %v465
        %v474 = vrsqrt.pop %v466
        %v475 = vrsqrt.pop %v467
        %v476 = vrsqrt.pop %v468
        %v477 = vrsqrt.pop %v469
        %v478 = vrsqrt.pop %v470
        %v479 = vmul.f32 %v415, %v471
        %v480 = vmul.f32 %v416, %v472
        %v481 = vmul.f32 %v417, %v473
        %v482 = vmul.f32 %v418, %v474
        %v483 = vmul.f32 %v419, %v475
        %v484 = vmul.f32 %v420, %v476
        %v485 = vmul.f32 %v421, %v477
        %v486 = vmul.f32 %v422, %v478
        %v487 = vld [vmem:[%s245] sm:$0xf]
        %v488 = vld [vmem:[%s245 + $0x4] sm:$0xf]
        %v489 = vld [vmem:[%s245 + $0x8] sm:$0xf]
        %v490 = vld [vmem:[%s245 + $0xc] sm:$0xf]
        %v491 = vld [vmem:[%s245 + $0x10] sm:$0xf]
        %v492 = vld [vmem:[%s245 + $0x14] sm:$0xf]
        %v493 = vld [vmem:[%s245 + $0x18] sm:$0xf]
        %v494 = vld [vmem:[%s245 + $0x1c] sm:$0xf]
        %v495 = vld [vmem:[%s3] sm:$0xf]
        %v496 = vld [vmem:[%s3 + $0x4] sm:$0xf]
        %v497 = vld [vmem:[%s3 + $0x8] sm:$0xf]
        %v498 = vld [vmem:[%s3 + $0xc] sm:$0x3]
        %v507 = vunpack.c.l.b16 %v487
        %v508 = vunpack.c.l.b16 %v488
        %v509 = vunpack.c.l.b16 %v489
        %v510 = vunpack.c.l.b16 %v490
        %v511 = vunpack.c.l.b16 %v491
        %v512 = vunpack.c.l.b16 %v492
        %v513 = vunpack.c.l.b16 %v493
        %v514 = vunpack.c.l.b16 %v494
        %v515 = vpack.c.b16 %v508, %v507
        %v516 = vpack.c.b16 %v510, %v509
        %v517 = vpack.c.b16 %v512, %v511
        %v518 = vpack.c.b16 %v514, %v513
        %v523 = vunpack.c.l.b16 %v495
        %v524 = vunpack.c.l.b16 %v496
        %v525 = vunpack.c.l.b16 %v497
        %v526 = vunpack.c.l.b16 %v498
        %v527 = vpack.c.b16 %v524, %v523
        %v528 = vpack.c.b16 %v526, %v525
        %531 = vrot.lane.b32.xlu0 %v265, 64
        %v532 = vpop.permute.xlu0 %531
        %v535 = vsel %vm297, %v515, 0
        %v538 = vsel %vm297, %v516, 0
        %v541 = vsel %vm297, %v517, 0
        %v544 = vsel %vm297, %v518, 0
        %v547 = vand.u32 %v528, %v313
        %549 = vmatprep.subr.bf16.mxu0 0
        %550 = vmatpush1.bf16.msra.mxu0 0
        %551 = vmatprep.subr.bf16.mxu0 0
        %552 = vmatpush1.bf16.msra.mxu0 0
        %553 = vmatprep.subr.bf16.mxu0 0
        %554 = vmatpush1.bf16.msra.mxu0 0
        %555 = vmatprep.subr.bf16.mxu0 0
        %556 = vmatpush1.bf16.msra.mxu0 0
        %557 = vmatprep.subr.bf16.mxu0 0
        %558 = vmatpush1.bf16.msra.mxu0 0
        %559 = vmatprep.subr.bf16.mxu0 0
        %560 = vmatpush1.bf16.msra.mxu0 0
        %561 = vmatprep.subr.bf16.mxu0 0
        %562 = vmatpush1.bf16.msra.mxu0 %v547
        %563 = vmatprep.subr.bf16.mxu0 0
        %564 = vmatpush1.bf16.msra.mxu0 %v527
        %565 = vmatprep.subr.bf16.mxu0 0
        %566 = vmatpush2.bf16.msra.mxu0 0
        %567 = vmatprep.subr.bf16.mxu0 0
        %568 = vmatpush2.bf16.msra.mxu0 0
        %569 = vmatprep.subr.bf16.mxu0 0
        %570 = vmatpush2.bf16.msra.mxu0 0
        %571 = vmatprep.subr.bf16.mxu0 0
        %572 = vmatpush2.bf16.msra.mxu0 0
        %573 = vmatprep.subr.bf16.mxu0 0
        %574 = vmatpush2.bf16.msra.mxu0 0
        %575 = vmatprep.subr.bf16.mxu0 0
        %576 = vmatpush2.bf16.msra.mxu0 0
        %577 = vmatprep.subr.bf16.mxu0 0
        %578 = vmatpush2.bf16.msra.mxu0 0
        %579 = vmatprep.subr.bf16.mxu0 0
        %580 = vmatpush2.bf16.msra.mxu0 0
        %581 = vmatprep.mubr.bf16.mxu0 0
        %582 = vmatmul.mubr.bf16.gmra.mxu0 %v535
        %v583 = vpop.f32.mrf.mxu0
        %v584 = vadd.f32 %v532, %v583
        %v585 = vpop.f32.mrf.mxu0
        %v586 = vpop.f32.mrf.mxu0
        %v587 = vadd.f32 %v532, %v586
        %v588 = vpop.f32.mrf.mxu0
        %589 = vmatprep.mubr.bf16.mxu0 0
        %590 = vmatmul.mubr.bf16.gmra.mxu0 %v538
        %v591 = vpop.f32.mrf.mxu0
        %v592 = vadd.f32 %v532, %v591
        %v593 = vpop.f32.mrf.mxu0
        %v594 = vpop.f32.mrf.mxu0
        %v595 = vadd.f32 %v532, %v594
        %v596 = vpop.f32.mrf.mxu0
        %597 = vmatprep.mubr.bf16.mxu0 0
        %598 = vmatmul.mubr.bf16.gmra.mxu0 %v541
        %v599 = vpop.f32.mrf.mxu0
        %v600 = vadd.f32 %v532, %v599
        %v601 = vpop.f32.mrf.mxu0
        %v602 = vpop.f32.mrf.mxu0
        %v603 = vadd.f32 %v532, %v602
        %v604 = vpop.f32.mrf.mxu0
        %605 = vmatprep.mubr.bf16.mxu0 0
        %606 = vmatmul.mubr.bf16.gmra.mxu0 %v544
        %v607 = vpop.f32.mrf.mxu0
        %v608 = vadd.f32 %v532, %v607
        %v609 = vpop.f32.mrf.mxu0
        %v610 = vpop.f32.mrf.mxu0
        %v611 = vadd.f32 %v532, %v610
        %v612 = vpop.f32.mrf.mxu0
        %613 = vdwg.mxu0
        %v614 = vsel %vm382, %v584, 0.0
        %615 = vadd.xlane.f32.xlu0 %v614
        %v616 = vpop.xlane.xlu0 %615
        %v617 = vsel %vm382, %v587, 0.0
        %618 = vadd.xlane.f32.xlu0 %v617
        %v619 = vpop.xlane.xlu0 %618
        %v620 = vsel %vm382, %v592, 0.0
        %621 = vadd.xlane.f32.xlu0 %v620
        %v622 = vpop.xlane.xlu0 %621
        %v623 = vsel %vm382, %v595, 0.0
        %624 = vadd.xlane.f32.xlu0 %v623
        %v625 = vpop.xlane.xlu0 %624
        %v626 = vsel %vm382, %v600, 0.0
        %627 = vadd.xlane.f32.xlu0 %v626
        %v628 = vpop.xlane.xlu0 %627
        %v629 = vsel %vm382, %v603, 0.0
        %630 = vadd.xlane.f32.xlu0 %v629
        %v631 = vpop.xlane.xlu0 %630
        %v632 = vsel %vm382, %v608, 0.0
        %633 = vadd.xlane.f32.xlu0 %v632
        %v634 = vpop.xlane.xlu0 %633
        %v635 = vsel %vm382, %v611, 0.0
        %636 = vadd.xlane.f32.xlu0 %v635
        %v637 = vpop.xlane.xlu0 %636
        %v638 = vmul.f32 %v616, 0.015625
        %v639 = vmul.f32 %v619, 0.015625
        %v640 = vmul.f32 %v622, 0.015625
        %v641 = vmul.f32 %v625, 0.015625
        %v642 = vmul.f32 %v628, 0.015625
        %v643 = vmul.f32 %v631, 0.015625
        %v644 = vmul.f32 %v634, 0.015625
        %v645 = vmul.f32 %v637, 0.015625
        %v646 = vsub.f32 %v584, %v638
        %v647 = vsub.f32 %v587, %v639
        %v648 = vsub.f32 %v592, %v640
        %v649 = vsub.f32 %v595, %v641
        %v650 = vsub.f32 %v600, %v642
        %v651 = vsub.f32 %v603, %v643
        %v652 = vsub.f32 %v608, %v644
        %v653 = vsub.f32 %v611, %v645
        %v654 = vmul.f32 %v646, %v646
        %v655 = vmul.f32 %v647, %v647
        %v656 = vmul.f32 %v648, %v648
        %v657 = vmul.f32 %v649, %v649
        %v658 = vmul.f32 %v650, %v650
        %v659 = vmul.f32 %v651, %v651
        %v660 = vmul.f32 %v652, %v652
        %v661 = vmul.f32 %v653, %v653
        %v662 = vsel %vm382, %v654, 0.0
        %663 = vadd.xlane.f32.xlu0 %v662
        %v664 = vpop.xlane.xlu0 %663
        %v665 = vsel %vm382, %v655, 0.0
        %666 = vadd.xlane.f32.xlu0 %v665
        %v667 = vpop.xlane.xlu0 %666
        %v668 = vsel %vm382, %v656, 0.0
        %669 = vadd.xlane.f32.xlu0 %v668
        %v670 = vpop.xlane.xlu0 %669
        %v671 = vsel %vm382, %v657, 0.0
        %672 = vadd.xlane.f32.xlu0 %v671
        %v673 = vpop.xlane.xlu0 %672
        %v674 = vsel %vm382, %v658, 0.0
        %675 = vadd.xlane.f32.xlu0 %v674
        %v676 = vpop.xlane.xlu0 %675
        %v677 = vsel %vm382, %v659, 0.0
        %678 = vadd.xlane.f32.xlu0 %v677
        %v679 = vpop.xlane.xlu0 %678
        %v680 = vsel %vm382, %v660, 0.0
        %681 = vadd.xlane.f32.xlu0 %v680
        %v682 = vpop.xlane.xlu0 %681
        %v683 = vsel %vm382, %v661, 0.0
        %684 = vadd.xlane.f32.xlu0 %v683
        %v685 = vpop.xlane.xlu0 %684
        %v686 = vmul.f32 %v664, 0.015625
        %v687 = vmul.f32 %v667, 0.015625
        %v688 = vmul.f32 %v670, 0.015625
        %v689 = vmul.f32 %v673, 0.015625
        %v690 = vmul.f32 %v676, 0.015625
        %v691 = vmul.f32 %v679, 0.015625
        %v692 = vmul.f32 %v682, 0.015625
        %v693 = vmul.f32 %v685, 0.015625
        %v694 = vadd.f32 %v686, 1e-05
        %v695 = vadd.f32 %v687, 1e-05
        %v696 = vadd.f32 %v688, 1e-05
        %v697 = vadd.f32 %v689, 1e-05
        %v698 = vadd.f32 %v690, 1e-05
        %v699 = vadd.f32 %v691, 1e-05
        %v700 = vadd.f32 %v692, 1e-05
        %v701 = vadd.f32 %v693, 1e-05
        %v702 = vrsqrt.pop %v694
        %v703 = vrsqrt.pop %v695
        %v704 = vrsqrt.pop %v696
        %v705 = vrsqrt.pop %v697
        %v706 = vrsqrt.pop %v698
        %v707 = vrsqrt.pop %v699
        %v708 = vrsqrt.pop %v700
        %v709 = vrsqrt.pop %v701
        %v710 = vmul.f32 %v646, %v702
        %v711 = vmul.f32 %v647, %v703
        %v712 = vmul.f32 %v648, %v704
        %v713 = vmul.f32 %v649, %v705
        %v714 = vmul.f32 %v650, %v706
        %v715 = vmul.f32 %v651, %v707
        %v716 = vmul.f32 %v652, %v708
        %v717 = vmul.f32 %v653, %v709
        %726 = vrot.lane.b32.xlu0 %v710, 64
        %v727 = vpop.permute.xlu0 %726
        %728 = vrot.lane.b32.xlu0 %v711, 64
        %v729 = vpop.permute.xlu0 %728
        %730 = vrot.lane.b32.xlu0 %v712, 64
        %v731 = vpop.permute.xlu0 %730
        %732 = vrot.lane.b32.xlu0 %v713, 64
        %v733 = vpop.permute.xlu0 %732
        %734 = vrot.lane.b32.xlu0 %v714, 64
        %v735 = vpop.permute.xlu0 %734
        %736 = vrot.lane.b32.xlu0 %v715, 64
        %v737 = vpop.permute.xlu0 %736
        %738 = vrot.lane.b32.xlu0 %v716, 64
        %v739 = vpop.permute.xlu0 %738
        %740 = vrot.lane.b32.xlu0 %v717, 64
        %v741 = vpop.permute.xlu0 %740
        %v750 = vsel %vm382, %v479, %v727
        %v751 = vsel %vm382, %v480, %v729
        %v752 = vsel %vm382, %v481, %v731
        %v753 = vsel %vm382, %v482, %v733
        %v754 = vsel %vm382, %v483, %v735
        %v755 = vsel %vm382, %v484, %v737
        %v756 = vsel %vm382, %v485, %v739
        %v757 = vsel %vm382, %v486, %v741
        %v758 = vlaneseq
        %v759 = vshrl.u32 %v758, 7
        %v760 = vsub.s32 1, %v759
        %v761 = vrot.slane %v249, %v760
        %v762 = vmul.f32 %v750, %v761
        %v763 = vmul.f32 %v751, %v761
        %v764 = vmul.f32 %v752, %v761
        %v765 = vmul.f32 %v753, %v761
        %v766 = vmul.f32 %v754, %v761
        %v767 = vmul.f32 %v755, %v761
        %v768 = vmul.f32 %v756, %v761
        %v769 = vmul.f32 %v757, %v761
        %v770 = vlaneseq
        %v771 = vshrl.u32 %v770, 7
        %v772 = vsub.s32 2, %v771
        %v773 = vrot.slane %v249, %v772
        %v774 = vadd.f32 %v762, %v773
        %v775 = vadd.f32 %v763, %v773
        %v776 = vadd.f32 %v764, %v773
        %v777 = vadd.f32 %v765, %v773
        %v778 = vadd.f32 %v766, %v773
        %v779 = vadd.f32 %v767, %v773
        %v780 = vadd.f32 %v768, %v773
        %v781 = vadd.f32 %v769, %v773
        %v782 = vpack.c.bf16 %v775, %v774
        %v783 = vpack.c.bf16 %v777, %v776
        %v784 = vpack.c.bf16 %v779, %v778
        %v785 = vpack.c.bf16 %v781, %v780
        %v790 = vunpack.c.l.b16 %v782
        %v791 = vunpack.c.h.b16 %v782
        %v792 = vunpack.c.l.b16 %v783
        %v793 = vunpack.c.h.b16 %v783
        %v794 = vunpack.c.l.b16 %v784
        %v795 = vunpack.c.h.b16 %v784
        %v796 = vunpack.c.l.b16 %v785
        %v797 = vunpack.c.h.b16 %v785
        %v798 = vpack.c.b16 %v790, %v790
        %v799 = vpack.c.b16 %v791, %v791
        %v800 = vpack.c.b16 %v792, %v792
        %v801 = vpack.c.b16 %v793, %v793
        %v802 = vpack.c.b16 %v794, %v794
        %v803 = vpack.c.b16 %v795, %v795
        %v804 = vpack.c.b16 %v796, %v796
        %v805 = vpack.c.b16 %v797, %v797
        %814 = vst [vmem:[%s234] sm:$0xf] %v798
        %815 = vst [vmem:[%s234 + $0x4] sm:$0xf] %v799
        %816 = vst [vmem:[%s234 + $0x8] sm:$0xf] %v800
        %817 = vst [vmem:[%s234 + $0xc] sm:$0xf] %v801
        %818 = vst [vmem:[%s234 + $0x10] sm:$0xf] %v802
        %819 = vst [vmem:[%s234 + $0x14] sm:$0xf] %v803
        %820 = vst [vmem:[%s234 + $0x18] sm:$0xf] %v804
        %821 = vst [vmem:[%s234 + $0x1c] sm:$0xf] %v805
        %s822 = sand.u32 %s142, 1
        %s823 = scalar_lea.sflag [#allocation3], %s822
        %s824 = sand.u32 %s142, 1
        %s825 = smul.addr %s824, 32
        %s826 = scalar_lea.vmem [#allocation2], %s825
        // Predicated region
        $region41: #{tpu_custom_call.1} parent=39 // pred_check
          %p827 = pneg %p152
        $region42: #{tpu_custom_call.1} parent=39 // pred_check_branch
          %829 = sbr.rel (%p827) target = $region44
        $region43: #{tpu_custom_call.1} parent=39 // pred_region
          %s830 = smul.u32 8, %s19
          %s832 = ssub.s32 512, 512
          %833 = vsyncadd %s823, %s832
          %s834 = smul.addr %s830, 64
          %s835 = scalar_lea.hbm %s5, %s834
          %s836 = sshll.u32 %s826, 4
          %s837 = int_to_ptr.vmem [resolvable:$true] %s836
          %842 = dma.vmem_to_hbm [thread:$0]  %s837, 512, %s835, %s823, 64, 64, 4
        $region44: #{tpu_custom_call.1} parent=39 // pred_fallthru
          _
      $region40: #{tpu_custom_call.1} parent=5 // pred_fallthru
        _
      %p843 = scmp.le.s32.totalorder 2, %s14
      // Predicated region
      $region45: #{tpu_custom_call.1} parent=5 // pred_check
        %p844 = pneg %p843
      $region46: #{tpu_custom_call.1} parent=5 // pred_check_branch
        %846 = sbr.rel (%p844) target = $region48
      $region47: #{tpu_custom_call.1} parent=5 // pred_region
        %s847 = ssub.s32 %s14, 2
        // Predicated region
        $region49: #{tpu_custom_call.1} parent=47 // pred_check
          %p848 = pneg %p158
        $region50: #{tpu_custom_call.1} parent=47 // pred_check_branch
          %850 = sbr.rel (%p848) target = $region52
        $region51: #{tpu_custom_call.1} parent=47 // pred_region
          %s851 = sand.u32 %s143, 1
          %s852 = scalar_lea.sflag [#allocation3], %s851
          %s853 = sand.u32 %s143, 1
          %s854 = smul.addr %s853, 32
          %s855 = scalar_lea.vmem [#allocation2], %s854
          %856 = dma.done %s852, 512
        $region52: #{tpu_custom_call.1} parent=47 // pred_fallthru
          _
      $region48: #{tpu_custom_call.1} parent=5 // pred_fallthru
        _
    $region6: #{tpu_custom_call.1} parent=1 // loop_footer
      %s18 = sadd.s32 1, %s14
    $region7: #{tpu_custom_call.1} parent=1 // loop_footer_branch
      %13 = sbr.rel target = $region3
    $region8: #{tpu_custom_call.1} parent=1 // loop_exit
      _
    %857 = vsyncpa [#allocation3], 1
    %s858 = scalar_lea.sflag [#allocation3], 1
    %859 = vsyncpa %s858, 1

</llo_original>
